<compile_context>
chip_gen: v7x
topology: tpu7x:2x2x1
jax: 0.10.0
libtpu: 0.0.40
codegen_flags: <defaults>
</compile_context>

<pallas_src>
import math

import jax
import jax.numpy as jnp
from jax.experimental import pallas as pl
from jax.experimental.pallas import tpu as pltpu


# Generation-portable VMEM budgets (v7x: 64 MiB physical / 32 MiB default
# scoped; v5e/v6e: 128 MiB physical).  48 MiB is above the v5e/v6e defaults and
# safely below v7x's physical capacity.
_VMEM_LIMIT_BYTES = 48 * 1024 * 1024
_ROW_TILE_BYTES = 2 * 1024 * 1024       # per-block budget for row-tiled matmuls
_HALO_PLANE_BYTES = 2 * 1024 * 1024     # per-plane budget for the halo 3x3 path

_COMPILER_PARAMS = pltpu.CompilerParams(
    dimension_semantics=("parallel",),
    vmem_limit_bytes=_VMEM_LIMIT_BYTES,
)


def _round_up(x, m):
    return ((x + m - 1) // m) * m


def _choose_row_tile(n_rows, bytes_per_row):
    """Largest power-of-two row tile (multiple of 8) within the VMEM budget."""
    cap = _round_up(max(n_rows, 8), 8)
    tile = 8
    for cand in (8, 16, 32, 64, 128, 256, 512, 1024, 2048, 4096):
        if cand <= cap and cand * bytes_per_row <= _ROW_TILE_BYTES:
            tile = cand
    return tile


# ----------------------------------------------------------------------------
# Row-tiled fused matmul kernels (used for every 1x1 conv and for im2col convs
# with the taps folded into K).
# ----------------------------------------------------------------------------
def _matmul_kernel(n_in, has_residual):
    """out = sum_i x_i @ w_i (+ residual); f32 MXU accumulation, no scratch."""

    def kernel(*refs):
        x_refs = refs[:n_in]
        w_refs = refs[n_in:2 * n_in]
        r_ref = refs[2 * n_in] if has_residual else None
        o_ref = refs[-1]
        acc = jnp.dot(x_refs[0][...], w_refs[0][...],
                      preferred_element_type=jnp.float32)
        for i in range(1, n_in):
            acc = acc + jnp.dot(x_refs[i][...], w_refs[i][...],
                                preferred_element_type=jnp.float32)
        if r_ref is not None:
            acc = acc + r_ref[...].astype(jnp.float32)
        o_ref[...] = acc.astype(o_ref.dtype)

    return kernel


def matmul_rows(xs, ws, *, residual=None, out_dtype=None):
    """Row-tiled fused matmul: out[r] = sum_i xs[i][r] @ ws[i] (+ residual[r]).

    xs[i]: (R, K_i), ws[i]: (K_i, Cout).  Weights are VMEM-resident (constant
    index_map).  Rows are tiled into multiples of 8; the single grid axis is
    'parallel' so both TensorCores get row tiles even at batch 1.
    """
    R = xs[0].shape[0]
    Cout = ws[0].shape[1]
    out_dtype = out_dtype or xs[0].dtype
    itemsize = max(jnp.dtype(x.dtype).itemsize for x in xs)
    bytes_per_row = (sum(x.shape[1] for x in xs) + Cout) * itemsize
    tile = _choose_row_tile(R, bytes_per_row)
    Rp = _round_up(R, tile)
    if Rp != R:
        xs = [jnp.pad(x, ((0, Rp - R), (0, 0))) for x in xs]
        if residual is not None:
            residual = jnp.pad(residual, ((0, Rp - R), (0, 0)))

    inputs, in_specs = [], []
    for x in xs:
        inputs.append(x)
        in_specs.append(pl.BlockSpec((tile, x.shape[1]), lambda m: (m, 0)))
    for w in ws:
        inputs.append(w)
        in_specs.append(pl.BlockSpec(w.shape, lambda m: (0, 0)))  # resident
    has_res = residual is not None
    if has_res:
        inputs.append(residual)
        in_specs.append(pl.BlockSpec((tile, Cout), lambda m: (m, 0)))

    out = pl.pallas_call(
        _matmul_kernel(len(xs), has_res),
        out_shape=jax.ShapeDtypeStruct((Rp, Cout), out_dtype),
        grid_spec=pltpu.PrefetchScalarGridSpec(
            num_scalar_prefetch=0,
            grid=(Rp // tile,),
            in_specs=in_specs,
            out_specs=pl.BlockSpec((tile, Cout), lambda m: (m, 0)),
        ),
        compiler_params=_COMPILER_PARAMS,
    )(*inputs)
    return out[:R]


def _matmul_multi_out_kernel(n_out):
    def kernel(*refs):
        x = refs[0][...]
        w_refs = refs[1:1 + n_out]
        o_refs = refs[1 + n_out:]
        for w_ref, o_ref in zip(w_refs, o_refs):
            o_ref[...] = jnp.dot(
                x, w_ref[...], preferred_element_type=jnp.float32
            ).astype(o_ref.dtype)

    return kernel


def matmul_rows_multi_out(x, ws, *, out_dtype=None):
    """Row-tiled matmul with several resident weights -> several outputs.

    Used to emit the base-layer channel chunk (x1, x2) directly instead of a
    full-width 1x1 conv followed by a lane-shuffling channel slice.
    """
    R, Cin = x.shape
    out_dtype = out_dtype or x.dtype
    itemsize = jnp.dtype(x.dtype).itemsize
    bytes_per_row = (Cin + sum(w.shape[1] for w in ws)) * itemsize
    tile = _choose_row_tile(R, bytes_per_row)
    Rp = _round_up(R, tile)
    if Rp != R:
        x = jnp.pad(x, ((0, Rp - R), (0, 0)))

    in_specs = [pl.BlockSpec((tile, Cin), lambda m: (m, 0))]
    in_specs += [pl.BlockSpec(w.shape, lambda m: (0, 0)) for w in ws]
    out_shape = tuple(jax.ShapeDtypeStruct((Rp, w.shape[1]), out_dtype) for w in ws)
    out_specs = [pl.BlockSpec((tile, w.shape[1]), lambda m: (m, 0)) for w in ws]

    outs = pl.pallas_call(
        _matmul_multi_out_kernel(len(ws)),
        out_shape=out_shape,
        grid_spec=pltpu.PrefetchScalarGridSpec(
            num_scalar_prefetch=0,
            grid=(Rp // tile,),
            in_specs=in_specs,
            out_specs=out_specs,
        ),
        compiler_params=_COMPILER_PARAMS,
    )(x, *ws)
    return tuple(o[:R] for o in outs)


# ----------------------------------------------------------------------------
# Halo 3x3 / stride-1 conv kernel (no im2col materialization), fused residual.
# ----------------------------------------------------------------------------
def _conv3x3_halo_kernel(H, W, Cout, has_residual):
    def kernel(*refs):
        if has_residual:
            x_ref, w_ref, r_ref, o_ref = refs
        else:
            x_ref, w_ref, o_ref = refs
            r_ref = None
        xp = x_ref[0]                                   # (H+2, W+2, Cin)
        acc = None
        for kh in range(3):
            for kw in range(3):
                tap = xp[kh:kh + H, kw:kw + W, :].reshape(H * W, -1)
                d = jnp.dot(tap, w_ref[kh * 3 + kw],
                            preferred_element_type=jnp.float32)
                acc = d if acc is None else acc + d
        out = acc.reshape(H, W, Cout)
        if r_ref is not None:
            out = out + r_ref[0].astype(jnp.float32)
        o_ref[0] = out.astype(o_ref.dtype)

    return kernel


def conv3x3_s1_pallas(x, w, *, residual=None):
    """3x3 / stride-1 / pad-1 conv (NHWC, HWIO) with optional fused residual.

    The padded plane is loaded once per grid step and the 9 taps are formed as
    in-VMEM slices, so the input is read from HBM exactly once (vs. the 9x
    im2col blowup).
    """
    N, H, W, Cin = x.shape
    KH, KW, _, Cout = w.shape
    assert KH == 3 and KW == 3

    itemsize = jnp.dtype(x.dtype).itemsize
    plane_bytes = (H + 2) * (W + 2) * Cin * itemsize + 2 * H * W * Cout * 4
    if W % 8 != 0 or plane_bytes > _HALO_PLANE_BYTES:
        # TODO(synk): strip-mined halo kernel (manual DMA with overlapping row
        # tiles) for large feature maps; fall back to row-tiled fold-K im2col.
        return conv2d_pallas(x, w, stride=1, padding=1, residual=residual)

    xp = jnp.pad(x, ((0, 0), (1, 1), (1, 1), (0, 0)))
    w_flat = w.reshape(9, Cin, Cout)

    inputs = [xp, w_flat]
    in_specs = [
        pl.BlockSpec((1, H + 2, W + 2, Cin), lambda n: (n, 0, 0, 0)),
        pl.BlockSpec((9, Cin, Cout), lambda n: (0, 0, 0)),      # resident
    ]
    has_res = residual is not None
    if has_res:
        inputs.append(residual)
        in_specs.append(pl.BlockSpec((1, H, W, Cout), lambda n: (n, 0, 0, 0)))

    return pl.pallas_call(
        _conv3x3_halo_kernel(H, W, Cout, has_res),
        out_shape=jax.ShapeDtypeStruct((N, H, W, Cout), x.dtype),
        grid_spec=pltpu.PrefetchScalarGridSpec(
            num_scalar_prefetch=0,
            grid=(N,),
            in_specs=in_specs,
            out_specs=pl.BlockSpec((1, H, W, Cout), lambda n: (n, 0, 0, 0)),
        ),
        compiler_params=_COMPILER_PARAMS,
    )(*inputs)


# ----------------------------------------------------------------------------
# General conv: 1x1 -> plain matmul (zero-copy reshape); otherwise im2col with
# the taps folded into the matmul K dimension (single dot per row tile).
# ----------------------------------------------------------------------------
def conv2d_pallas(x, w, *, stride=1, padding=0, residual=None):
    N, H, W, Cin = x.shape
    KH, KW, _, Cout = w.shape
    Ho = (H + 2 * padding - KH) // stride + 1
    Wo = (W + 2 * padding - KW) // stride + 1
    R = N * Ho * Wo

    if KH == 1 and KW == 1 and stride == 1 and padding == 0:
        patches = x.reshape(R, Cin)
    else:
        xp = jnp.pad(x, ((0, 0), (padding, padding), (padding, padding), (0, 0)))
        taps = []
        for kh in range(KH):
            for kw in range(KW):
                taps.append(
                    xp[:, kh:kh + stride * (Ho - 1) + 1:stride,
                       kw:kw + stride * (Wo - 1) + 1:stride, :])
        patches = jnp.concatenate(taps, axis=-1).reshape(R, KH * KW * Cin)
    w_flat = w.reshape(KH * KW * Cin, Cout)
    res_flat = residual.reshape(R, Cout) if residual is not None else None
    out = matmul_rows([patches], [w_flat], residual=res_flat, out_dtype=x.dtype)
    return out.reshape(N, Ho, Wo, Cout)


# ----------------------------------------------------------------------------
# Parameter init (deterministic, matches the PyTorch module's shapes).
# ----------------------------------------------------------------------------
def init_csp_stage_params(key, in_channels, out_channels, num_blocks=1):
    compression = 2 if num_blocks > 1 else 1
    hidden = out_channels // compression
    mid = hidden if num_blocks > 1 else in_channels

    n_weights = 4 + 2 * num_blocks
    keys = list(jax.random.split(key, n_weights))
    kit = iter(keys)

    def make_w(k, kh, kw, ci, co):
        scale = 1.0 / math.sqrt(kh * kw * ci)
        return jax.random.normal(k, (kh, kw, ci, co), dtype=jnp.float32) * scale

    params = {
        "base1": make_w(next(kit), 3, 3, in_channels, out_channels),
        "base2": make_w(next(kit), 1, 1, out_channels, 2 * out_channels // compression),
        "blocks": [
            (
                make_w(next(kit), 1, 1, hidden, mid),
                make_w(next(kit), 3, 3, mid, hidden),
            )
            for _ in range(num_blocks)
        ],
        "main_out": make_w(next(kit), 1, 1, hidden, hidden),
        "transition": make_w(next(kit), 1, 1, 2 * hidden, out_channels),
    }
    return params


# ----------------------------------------------------------------------------
# CSPStage forward (Pallas) -- NCHW in / NCHW out like the PyTorch module.
# ----------------------------------------------------------------------------
def csp_stage_pallas(x_nchw, params, compute_dtype=jnp.float32):
    """`compute_dtype=jnp.bfloat16` runs the MXU in bf16 with f32 accumulation
    (2x MXU throughput, half the activation HBM traffic)."""
    cd = compute_dtype
    x = jnp.transpose(x_nchw, (0, 2, 3, 1)).astype(cd)       # NHWC

    # base_layer: 3x3 stride-2 conv, then a 1x1 that directly emits the two
    # channel chunks (chunk fused by splitting base2's weight along Cout).
    x = conv2d_pallas(x, params["base1"].astype(cd), stride=2, padding=1)
    N, Hb, Wb, Cb = x.shape
    w_b2 = params["base2"].astype(cd)[0, 0]                  # (Cb, 2*hidden)
    hidden = w_b2.shape[1] // 2
    x_flat = x.reshape(-1, Cb)
    x1_flat, x2_flat = matmul_rows_multi_out(
        x_flat, [w_b2[:, :hidden], w_b2[:, hidden:]])

    # main: ResBlocks (1x1 -> 3x3 + identity), then a 1x1.
    h = x2_flat.reshape(N, Hb, Wb, hidden)
    for w1, w2 in params["blocks"]:
        # TODO(synk): fuse the 1x1 into the 3x3 halo kernel so `m` never
        # round-trips HBM (its output is consumed immediately by the 3x3).
        m = conv2d_pallas(h, w1.astype(cd), stride=1, padding=0)
        h = conv3x3_s1_pallas(m, w2.astype(cd), residual=h)  # fused skip-add
    h_flat = matmul_rows([h.reshape(-1, hidden)],
                         [params["main_out"].astype(cd)[0, 0]])

    # transition(cat([x1, main(x2)])) without materializing the concat:
    # split the transition weight along Cin and accumulate two dots in-kernel.
    w_tr = params["transition"].astype(cd)[0, 0]             # (2*hidden, Cout)
    y_flat = matmul_rows([x1_flat, h_flat], [w_tr[:hidden], w_tr[hidden:]])
    y = y_flat.reshape(N, Hb, Wb, w_tr.shape[1])
    return jnp.transpose(y, (0, 3, 1, 2))


# ----------------------------------------------------------------------------
# Pure-JAX reference (lax.conv) for correctness checking.
# ----------------------------------------------------------------------------
def _conv_ref(x, w, stride, padding):
    return jax.lax.conv_general_dilated(
        x, w,
        window_strides=(stride, stride),
        padding=[(padding, padding), (padding, padding)],
        dimension_numbers=("NHWC", "HWIO", "NHWC"))


def csp_stage_ref(x_nchw, params):
    x = jnp.transpose(x_nchw, (0, 2, 3, 1))
    x = _conv_ref(x, params["base1"], 2, 1)
    x = _conv_ref(x, params["base2"], 1, 0)
    c = x.shape[-1]
    x1, x2 = x[..., : c // 2], x[..., c // 2:]
    h = x2
    for w1, w2 in params["blocks"]:
        h = _conv_ref(_conv_ref(h, w1, 1, 0), w2, 1, 1) + h
    h = _conv_ref(h, params["main_out"], 1, 0)
    y = _conv_ref(jnp.concatenate([x1, h], axis=-1), params["transition"], 1, 0)
    return jnp.transpose(y, (0, 3, 1, 2))


# ----------------------------------------------------------------------------
if __name__ == "__main__":
    key = jax.random.PRNGKey(0)
    kx, kp1, kp2 = jax.random.split(key, 3)

    # Matches the PyTorch module with in_channels=4, out_channels=8.
    x = jax.random.normal(kx, (2, 4, 16, 16), dtype=jnp.float32)  # NCHW

    # num_blocks = 1 (module default)
    params1 = init_csp_stage_params(kp1, in_channels=4, out_channels=8, num_blocks=1)
    out1 = jax.block_until_ready(csp_stage_pallas(x, params1))
    ref1 = csp_stage_ref(x, params1)
    assert out1.shape == (2, 8, 8, 8), out1.shape
    assert jnp.allclose(out1, ref1, rtol=1e-4, atol=1e-4), "num_blocks=1 mismatch"

    # num_blocks = 2 (exercises compression=2 branch)
    params2 = init_csp_stage_params(kp2, in_channels=4, out_channels=8, num_blocks=2)
    out2 = jax.block_until_ready(csp_stage_pallas(x, params2))
    ref2 = csp_stage_ref(x, params2)
    assert out2.shape == (2, 8, 8, 8), out2.shape
    assert jnp.allclose(out2, ref2, rtol=1e-4, atol=1e-4), "num_blocks=2 mismatch"

    # bf16 MXU path (f32 accumulation) -- looser tolerance.
    out_bf16 = jax.block_until_ready(
        csp_stage_pallas(x, params1, compute_dtype=jnp.bfloat16))
    assert out_bf16.shape == (2, 8, 8, 8), out_bf16.shape
    assert jnp.allclose(out_bf16.astype(jnp.float32), ref1, rtol=1e-1, atol=1e-1), \
        "bf16 path mismatch"

    print("KERNEL_OK")
</pallas_src>

<mosaic_0001>
module attributes {stable_mosaic.version = 11 : i64} {
  func.func @kernel(%arg0: i32, %arg1: memref<128x36xf32, #tpu.memory_space<vmem>>, %arg2: memref<36x8xf32, #tpu.memory_space<vmem>>, %arg3: memref<128x8xf32, #tpu.memory_space<vmem>>) attributes {dimension_semantics = [#tpu.dimension_semantics<parallel>], iteration_bounds = array<i64: 1>, scalar_prefetch = 0 : i64, scratch_operands = 0 : i64, tpu.core_type = #tpu.core_type<tc>, window_params = [{transform_indices = @transform_0, window_bounds = array<i64: 128, 36>}, {pipeline_mode = #tpu.pipeline_mode<synchronous>, transform_indices = @transform_1, window_bounds = array<i64: 36, 8>}, {transform_indices = @transform_2, window_bounds = array<i64: 128, 8>}]} {
    %c0 = arith.constant 0 : index
    %c0_0 = arith.constant 0 : index
    %0 = vector.load %arg1[%c0, %c0_0] : memref<128x36xf32, #tpu.memory_space<vmem>>, vector<128x36xf32>
    %c0_1 = arith.constant 0 : index
    %c0_2 = arith.constant 0 : index
    %1 = vector.load %arg2[%c0_1, %c0_2] : memref<36x8xf32, #tpu.memory_space<vmem>>, vector<36x8xf32>
    %cst = arith.constant dense<0.000000e+00> : vector<128x8xf32>
    %2 = tpu.matmul %0, %1, %cst {dimension_numbers = #tpu.dot_dimension_numbers<[1], [0], [0], [1], [0, 0, 1, 1], [], []>} : vector<128x36xf32>, vector<36x8xf32>, vector<128x8xf32> -> vector<128x8xf32>
    %c0_3 = arith.constant 0 : index
    %c0_4 = arith.constant 0 : index
    %3 = vector.load %arg3[%c0_3, %c0_4] : memref<128x8xf32, #tpu.memory_space<vmem>>, vector<128x8xf32>
    tpu.vector_store %arg3[%c0_3, %c0_4], %2 {strides = array<i32>} : memref<128x8xf32, #tpu.memory_space<vmem>>, vector<128x8xf32>,
    return
  }
  func.func @transform_0(%arg0: i32) -> (i32, i32) {
    %c0_i32 = arith.constant 0 : i32
    %c0_i32_0 = arith.constant 0 : i32
    return %arg0, %c0_i32 : i32, i32
  }
  func.func @transform_1(%arg0: i32) -> (i32, i32) {
    %c0_i32 = arith.constant 0 : i32
    %c0_i32_0 = arith.constant 0 : i32
    %c0_i32_1 = arith.constant 0 : i32
    return %c0_i32, %c0_i32_0 : i32, i32
  }
  func.func @transform_2(%arg0: i32) -> (i32, i32) {
    %c0_i32 = arith.constant 0 : i32
    %c0_i32_0 = arith.constant 0 : i32
    return %arg0, %c0_i32 : i32, i32
  }
}

</mosaic_0001>

<llo_original>
// kernel: tpu_custom_call.1
$region0: #{tpu_custom_call.1}
  #allocation0 [shape = 'u32[]', space=smem, size = 0x4, offset = 0x4, fixed_abs, tag = 'smem constant byte address 0x4 - core index']
  #allocation1 [shape = 'u32[144,128]{1,0:T(1,128)}', space=vmem, size = 0x12000, scoped, tag = 'internal scratch']
  %s0 = inlined_call_operand.vmem [shape: f32[128,36], index: 0, kind: input, shape index: {}]
  %s1 = inlined_call_operand.vmem [shape: f32[36,8], index: 1, kind: input, shape index: {}]
  %s2 = inlined_call_operand.vmem [shape: f32[128,8], index: 2, kind: output, shape index: {}]
  %s3 = sld [smem:[#allocation0]]
  $region18: #{tpu_custom_call.1} parent=0
    _
  %s5 = ssub.s32 1, %s3
  %s6 = scalar_select 0, %s5, %s3
  // Predicated region
  $region2: #{tpu_custom_call.1} parent=0 // pred_check
    _
  $region3: #{tpu_custom_call.1} parent=0 // pred_check_branch
    %8 = sbr.rel (0) target = $region5
  $region4: #{tpu_custom_call.1} parent=0 // pred_region
    _
  $region5: #{tpu_custom_call.1} parent=0 // pred_fallthru
    _
  // Predicated region
  $region6: #{tpu_custom_call.1} parent=0 // pred_check
    _
  $region7: #{tpu_custom_call.1} parent=0 // pred_check_branch
    %10 = sbr.rel (0) target = $region9
  $region8: #{tpu_custom_call.1} parent=0 // pred_region
    _
  $region9: #{tpu_custom_call.1} parent=0 // pred_fallthru
    _
  %v11 = vld [vmem:[%s0] sm:$0xff]
  %v12 = vld [vmem:[%s0 + $0x8] sm:$0xff]
  %v13 = vld [vmem:[%s0 + $0x10] sm:$0xff]
  %v14 = vld [vmem:[%s0 + $0x18] sm:$0xff]
  %v15 = vld [vmem:[%s0 + $0x20] sm:$0xff]
  %v16 = vld [vmem:[%s0 + $0x28] sm:$0xff]
  %v17 = vld [vmem:[%s0 + $0x30] sm:$0xff]
  %v18 = vld [vmem:[%s0 + $0x38] sm:$0xff]
  %v19 = vld [vmem:[%s0 + $0x40] sm:$0xff]
  %v20 = vld [vmem:[%s0 + $0x48] sm:$0xff]
  %v21 = vld [vmem:[%s0 + $0x50] sm:$0xff]
  %v22 = vld [vmem:[%s0 + $0x58] sm:$0xff]
  %v23 = vld [vmem:[%s0 + $0x60] sm:$0xff]
  %v24 = vld [vmem:[%s0 + $0x68] sm:$0xff]
  %v25 = vld [vmem:[%s0 + $0x70] sm:$0xff]
  %v26 = vld [vmem:[%s0 + $0x78] sm:$0xff]
  %v27 = vld [vmem:[%s1] sm:$0xff]
  %v28 = vld [vmem:[%s1 + $0x8] sm:$0xff]
  %v29 = vld [vmem:[%s1 + $0x10] sm:$0xff]
  %v30 = vld [vmem:[%s1 + $0x18] sm:$0xff]
  %v31 = vld [vmem:[%s1 + $0x20] sm:$0xf]
  %vm32 = vcmask 293888
  %v34 = vsel %vm32, %v11, 0
  %v37 = vsel %vm32, %v12, 0
  %v40 = vsel %vm32, %v13, 0
  %v43 = vsel %vm32, %v14, 0
  %v46 = vsel %vm32, %v15, 0
  %v49 = vsel %vm32, %v16, 0
  %v52 = vsel %vm32, %v17, 0
  %v55 = vsel %vm32, %v18, 0
  %v58 = vsel %vm32, %v19, 0
  %v61 = vsel %vm32, %v20, 0
  %v64 = vsel %vm32, %v21, 0
  %v67 = vsel %vm32, %v22, 0
  %v70 = vsel %vm32, %v23, 0
  %v73 = vsel %vm32, %v24, 0
  %v76 = vsel %vm32, %v25, 0
  %v79 = vsel %vm32, %v26, 0
  %vm81 = vcmask 1043456
  %v83 = vsel %vm81, %v31, 0
  %85 = vmatprep.subr.mxu0 0.0
  %86 = vmatpush1.msra.mxu0 %v27
  %87 = vmatprep.subr.mxu0 0.0
  %88 = vmatpush1.msra.mxu0 %v28
  %89 = vmatprep.subr.mxu0 0.0
  %90 = vmatpush1.msra.mxu0 %v29
  %91 = vmatprep.subr.mxu0 0.0
  %92 = vmatpush1.msra.mxu0 %v30
  %93 = vmatprep.subr.mxu0 0.0
  %94 = vmatpush1.msra.mxu0 %v83
  %95 = vmatprep.subr.mxu0 0.0
  %96 = vmatpush1.msra.mxu0 0.0
  %97 = vmatprep.subr.mxu0 0.0
  %98 = vmatpush1.msra.mxu0 0.0
  %99 = vmatprep.subr.mxu0 0.0
  %100 = vmatpush1.msra.mxu0 0.0
  %101 = vmatprep.subr.mxu0 0.0
  %102 = vmatpush1.msra.mxu0 0.0
  %103 = vmatprep.subr.mxu0 0.0
  %104 = vmatpush1.msra.mxu0 0.0
  %105 = vmatprep.subr.mxu0 0.0
  %106 = vmatpush1.msra.mxu0 0.0
  %107 = vmatprep.subr.mxu0 0.0
  %108 = vmatpush1.msra.mxu0 0.0
  %109 = vmatprep.subr.mxu0 0.0
  %110 = vmatpush1.msra.mxu0 0.0
  %111 = vmatprep.subr.mxu0 0.0
  %112 = vmatpush1.msra.mxu0 0.0
  %113 = vmatprep.subr.mxu0 0.0
  %114 = vmatpush1.msra.mxu0 0.0
  %115 = vmatprep.subr.mxu0 0.0
  %116 = vmatpush1.msra.mxu0 0.0
  %117 = vmatprep.subr.mxu0 0.0
  %118 = vmatpush1.msra.mxu0 0.0
  %119 = vmatprep.subr.mxu0 0.0
  %120 = vmatpush1.msra.mxu0 0.0
  %121 = vmatprep.subr.mxu0 0.0
  %122 = vmatpush1.msra.mxu0 0.0
  %123 = vmatprep.subr.mxu0 0.0
  %124 = vmatpush1.msra.mxu0 0.0
  %125 = vmatprep.subr.mxu0 0.0
  %126 = vmatpush1.msra.mxu0 0.0
  %127 = vmatprep.subr.mxu0 0.0
  %128 = vmatpush1.msra.mxu0 0.0
  %129 = vmatprep.subr.mxu0 0.0
  %130 = vmatpush1.msra.mxu0 0.0
  %131 = vmatprep.subr.mxu0 0.0
  %132 = vmatpush1.msra.mxu0 0.0
  %133 = vmatprep.subr.mxu0 0.0
  %134 = vmatpush1.msra.mxu0 0.0
  %135 = vmatprep.subr.mxu0 0.0
  %136 = vmatpush1.msra.mxu0 0.0
  %137 = vmatprep.subr.mxu0 0.0
  %138 = vmatpush1.msra.mxu0 0.0
  %139 = vmatprep.subr.mxu0 0.0
  %140 = vmatpush1.msra.mxu0 0.0
  %141 = vmatprep.subr.mxu0 0.0
  %142 = vmatpush1.msra.mxu0 0.0
  %143 = vmatprep.subr.mxu0 0.0
  %144 = vmatpush1.msra.mxu0 0.0
  %145 = vmatprep.subr.mxu0 0.0
  %146 = vmatpush1.msra.mxu0 0.0
  %147 = vmatprep.subr.mxu0 0.0
  %148 = vmatpush1.msra.mxu0 0.0
  %149 = vmatprep.mubr.f32.mxu0 0.0
  %150 = vmatmul.mubr.f32.gmra.mrb[0].mxu0 %v34
  %v151 = vpop.f32.mrb[0].mxu0
  %v152 = vadd.f32 0.0, %v151
  %v153 = vpop.f32.mrb[0].mxu0
  %154 = vmatprep.mubr.f32.mxu0 0.0
  %155 = vmatmul.mubr.f32.gmra.mrb[0].mxu0 %v37
  %v156 = vpop.f32.mrb[0].mxu0
  %v157 = vadd.f32 0.0, %v156
  %v158 = vpop.f32.mrb[0].mxu0
  %159 = vmatprep.mubr.f32.mxu0 0.0
  %160 = vmatmul.mubr.f32.gmra.mrb[0].mxu0 %v40
  %v161 = vpop.f32.mrb[0].mxu0
  %v162 = vadd.f32 0.0, %v161
  %v163 = vpop.f32.mrb[0].mxu0
  %164 = vmatprep.mubr.f32.mxu0 0.0
  %165 = vmatmul.mubr.f32.gmra.mrb[0].mxu0 %v43
  %v166 = vpop.f32.mrb[0].mxu0
  %v167 = vadd.f32 0.0, %v166
  %v168 = vpop.f32.mrb[0].mxu0
  %169 = vmatprep.mubr.f32.mxu0 0.0
  %170 = vmatmul.mubr.f32.gmra.mrb[0].mxu0 %v46
  %v171 = vpop.f32.mrb[0].mxu0
  %v172 = vadd.f32 0.0, %v171
  %v173 = vpop.f32.mrb[0].mxu0
  %174 = vmatprep.mubr.f32.mxu0 0.0
  %175 = vmatmul.mubr.f32.gmra.mrb[0].mxu0 %v49
  %v176 = vpop.f32.mrb[0].mxu0
  %v177 = vadd.f32 0.0, %v176
  %v178 = vpop.f32.mrb[0].mxu0
  %179 = vmatprep.mubr.f32.mxu0 0.0
  %180 = vmatmul.mubr.f32.gmra.mrb[0].mxu0 %v52
  %v181 = vpop.f32.mrb[0].mxu0
  %v182 = vadd.f32 0.0, %v181
  %v183 = vpop.f32.mrb[0].mxu0
  %184 = vmatprep.mubr.f32.mxu0 0.0
  %185 = vmatmul.mubr.f32.gmra.mrb[0].mxu0 %v55
  %v186 = vpop.f32.mrb[0].mxu0
  %v187 = vadd.f32 0.0, %v186
  %v188 = vpop.f32.mrb[0].mxu0
  %189 = vmatprep.mubr.f32.mxu0 0.0
  %190 = vmatmul.mubr.f32.gmra.mrb[0].mxu0 %v58
  %v191 = vpop.f32.mrb[0].mxu0
  %v192 = vadd.f32 0.0, %v191
  %v193 = vpop.f32.mrb[0].mxu0
  %194 = vmatprep.mubr.f32.mxu0 0.0
  %195 = vmatmul.mubr.f32.gmra.mrb[0].mxu0 %v61
  %v196 = vpop.f32.mrb[0].mxu0
  %v197 = vadd.f32 0.0, %v196
  %v198 = vpop.f32.mrb[0].mxu0
  %199 = vmatprep.mubr.f32.mxu0 0.0
  %200 = vmatmul.mubr.f32.gmra.mrb[0].mxu0 %v64
  %v201 = vpop.f32.mrb[0].mxu0
  %v202 = vadd.f32 0.0, %v201
  %v203 = vpop.f32.mrb[0].mxu0
  %204 = vmatprep.mubr.f32.mxu0 0.0
  %205 = vmatmul.mubr.f32.gmra.mrb[0].mxu0 %v67
  %v206 = vpop.f32.mrb[0].mxu0
  %v207 = vadd.f32 0.0, %v206
  %v208 = vpop.f32.mrb[0].mxu0
  %209 = vmatprep.mubr.f32.mxu0 0.0
  %210 = vmatmul.mubr.f32.gmra.mrb[0].mxu0 %v70
  %v211 = vpop.f32.mrb[0].mxu0
  %v212 = vadd.f32 0.0, %v211
  %v213 = vpop.f32.mrb[0].mxu0
  %214 = vmatprep.mubr.f32.mxu0 0.0
  %215 = vmatmul.mubr.f32.gmra.mrb[0].mxu0 %v73
  %v216 = vpop.f32.mrb[0].mxu0
  %v217 = vadd.f32 0.0, %v216
  %v218 = vpop.f32.mrb[0].mxu0
  %219 = vmatprep.mubr.f32.mxu0 0.0
  %220 = vmatmul.mubr.f32.gmra.mrb[0].mxu0 %v76
  %v221 = vpop.f32.mrb[0].mxu0
  %v222 = vadd.f32 0.0, %v221
  %v223 = vpop.f32.mrb[0].mxu0
  %224 = vmatprep.mubr.f32.mxu0 0.0
  %225 = vmatmul.mubr.f32.gmra.mrb[0].mxu0 %v79
  %v226 = vpop.f32.mrb[0].mxu0
  %v227 = vadd.f32 0.0, %v226
  %v228 = vpop.f32.mrb[0].mxu0
  %229 = vdwg.mxu0
  %vm230 = vcmask 64512
  %231 = vst.msk [vmem:[%s2] sm:$0xff] %vm230, %v152
  %232 = vst.msk [vmem:[%s2 + $0x8] sm:$0xff] %vm230, %v157
  %233 = vst.msk [vmem:[%s2 + $0x10] sm:$0xff] %vm230, %v162
  %234 = vst.msk [vmem:[%s2 + $0x18] sm:$0xff] %vm230, %v167
  %235 = vst.msk [vmem:[%s2 + $0x20] sm:$0xff] %vm230, %v172
  %236 = vst.msk [vmem:[%s2 + $0x28] sm:$0xff] %vm230, %v177
  %237 = vst.msk [vmem:[%s2 + $0x30] sm:$0xff] %vm230, %v182
  %238 = vst.msk [vmem:[%s2 + $0x38] sm:$0xff] %vm230, %v187
  %239 = vst.msk [vmem:[%s2 + $0x40] sm:$0xff] %vm230, %v192
  %240 = vst.msk [vmem:[%s2 + $0x48] sm:$0xff] %vm230, %v197
  %241 = vst.msk [vmem:[%s2 + $0x50] sm:$0xff] %vm230, %v202
  %242 = vst.msk [vmem:[%s2 + $0x58] sm:$0xff] %vm230, %v207
  %243 = vst.msk [vmem:[%s2 + $0x60] sm:$0xff] %vm230, %v212
  %244 = vst.msk [vmem:[%s2 + $0x68] sm:$0xff] %vm230, %v217
  %245 = vst.msk [vmem:[%s2 + $0x70] sm:$0xff] %vm230, %v222
  %246 = vst.msk [vmem:[%s2 + $0x78] sm:$0xff] %vm230, %v227
  // Predicated region
  $region10: #{tpu_custom_call.1} parent=0 // pred_check
    _
  $region11: #{tpu_custom_call.1} parent=0 // pred_check_branch
    %248 = sbr.rel (0) target = $region13
  $region12: #{tpu_custom_call.1} parent=0 // pred_region
    _
  $region13: #{tpu_custom_call.1} parent=0 // pred_fallthru
    _
  // Predicated region
  $region14: #{tpu_custom_call.1} parent=0 // pred_check
    _
  $region15: #{tpu_custom_call.1} parent=0 // pred_check_branch
    %250 = sbr.rel (0) target = $region17
  $region16: #{tpu_custom_call.1} parent=0 // pred_region
    _
  $region17: #{tpu_custom_call.1} parent=0 // pred_fallthru
    _

</llo_original>
